<compile_context>
chip_gen: v7x
topology: tpu7x:2x2x1
jax: 0.10.0
libtpu: 0.0.40
codegen_flags: <defaults>
</compile_context>

<pallas_src>
import jax
import jax.numpy as jnp
from jax import lax
from jax.experimental import pallas as pl
from jax.experimental.pallas import tpu as pltpu

# ---- module configuration (small, consistent with the PyTorch __init__) ----
BATCH = 8
IN_FEATURES = 32
GRID_SIZE = (4, 8)                       # -> proj out_features = sum(grid_size) = 12
G_TOTAL = GRID_SIZE[0] * GRID_SIZE[1]    # 32 experts in the product grid
K_BEST = 4

# v7x-safe batch tile: lane-padded f32 x-tile (TB,128) + output slab (TB,128),
# double-buffered ~= TB * 2 KiB ~= 8 MiB at TB=4096 — comfortably inside v7x's
# 32 MiB scoped default / 64 MiB physical VMEM, and leaves >=2 grid steps for
# production batches > 4096 so both v7x TensorCores get work.  v5e/v6e
# (128 MiB VMEM) can take 2-4x larger tiles.
TB_MAX = 4096


def fused_gating_kernel(x_ref, w_ref, b_ref, out_ref):
    """Fused projection(+combine) + top-k + softmax.

    x_ref:   (TB, F)        float32
    w_ref:   (F, G0*G1)     float32   expanded weights W' (resident across grid)
    b_ref:   (1, G0*G1)     float32   expanded bias b'    (resident across grid)
    out_ref: (TB, 3*K)      float32   [top-k logits | softmax weights | bitcast(int32 idx)]
    """
    # 1) projection with the product-space combine pre-folded into W'/b':
    #    flat[b, i*G1 + j] = x[b] . (W[:,i] + W[:,G0+j]) + (b[i] + b[G0+j])
    flat = jnp.dot(x_ref[...], w_ref[...],
                   preferred_element_type=jnp.float32) + b_ref[...]   # (TB, GT)
    gt = flat.shape[-1]

    # 2) exact beam search over the full product space == top-k over `flat`.
    #    k unrolled max + first-index argmax + mask; each sample is one 32-lane
    #    segment of a vreg row.  Knock-out uses `lane == a_i` (only the chosen
    #    lane) so tie handling matches lax.top_k exactly.
    lane = lax.broadcasted_iota(jnp.int32, flat.shape, 1)
    work = flat
    top_vals = []
    top_idxs = []
    for _ in range(K_BEST):
        m = jnp.max(work, axis=-1, keepdims=True)                      # (TB, 1)
        is_max = work == m
        a_i = jnp.min(jnp.where(is_max, lane, gt),
                      axis=-1, keepdims=True)                          # (TB, 1) int32
        top_vals.append(m)
        top_idxs.append(a_i)
        work = jnp.where(lane == a_i, -jnp.inf, work)

    logits = jnp.concatenate(top_vals, axis=-1)                        # (TB, K)
    flat_idx = jnp.concatenate(top_idxs, axis=-1)                      # (TB, K) int32

    # 3) softmax over the chosen experts' logits.  logits[:, :1] is the row max
    #    (top-1), so the subtraction is numerically stable for free.  EXACT
    #    divide: downstream weighted averaging expects weights that sum to 1.
    e = jnp.exp(logits - top_vals[0])
    weights = e / jnp.sum(e, axis=-1, keepdims=True)

    # 4) single lane-packed output slab: [logits | weights | bitcast(indices)].
    out_ref[...] = jnp.concatenate(
        [logits, weights, lax.bitcast_convert_type(flat_idx, jnp.float32)],
        axis=-1)


def gating_forward(x, w, b):
    """Returns (expert_grid_indices, expert_logits, expert_weights)."""
    g0, g1 = GRID_SIZE
    bsz, f = x.shape
    gt = g0 * g1
    k = K_BEST

    # One-time prep (XLA side; in production fold this into the weight
    # pipeline): expand the projection so the product-space combine is linear
    # in W/b:  W'[:, i*g1 + j] = W[:, i] + W[:, g0 + j],  b' likewise.
    w_flat = (w[:, :g0, None] + w[:, None, g0:g0 + g1]).reshape(f, gt)
    b_flat = (b[:, :g0, None] + b[:, None, g0:g0 + g1]).reshape(1, gt)

    tb = min(bsz, TB_MAX)
    grid = (pl.cdiv(bsz, tb),)

    # Lane-padded f32 tiles (x + output slab, double-buffered) + resident
    # W'/b' + headroom; floor at 16 MiB so small demos keep the default.
    vmem_limit = int(max(16 * 1024 * 1024, 4 * tb * 128 * 4 + (2 << 20)))

    slab = pl.pallas_call(
        fused_gating_kernel,
        out_shape=jax.ShapeDtypeStruct((bsz, 3 * k), jnp.float32),
        grid=grid,
        in_specs=[
            pl.BlockSpec((tb, f), lambda i: (i, 0)),       # x: batch-tiled
            pl.BlockSpec((f, gt), lambda i: (0, 0)),       # W': resident
            pl.BlockSpec((1, gt), lambda i: (0, 0)),       # b': resident
        ],
        out_specs=pl.BlockSpec((tb, 3 * k), lambda i: (i, 0)),
        compiler_params=pltpu.CompilerParams(
            dimension_semantics=("parallel",),             # megacore on v7x
            vmem_limit_bytes=vmem_limit),
    )(x, w_flat, b_flat)

    top_logits = slab[:, :k]
    weights = slab[:, k:2 * k]
    flat_idx = lax.bitcast_convert_type(slab[:, 2 * k:3 * k], jnp.int32)

    # glue: decode flat product index back to per-dimension grid indices
    # (the "expert uid" of the original module).
    expert_idx = jnp.stack([flat_idx // g1, flat_idx % g1], axis=-1)
    return expert_idx, top_logits, weights


def _reference(x, w, b):
    g0, g1 = GRID_SIZE
    scores = x @ w + b
    s0, s1 = scores[:, :g0], scores[:, g0:g0 + g1]
    flat = (s0[:, :, None] + s1[:, None, :]).reshape(x.shape[0], g0 * g1)
    top_logits, top_idx = jax.lax.top_k(flat, K_BEST)
    weights = jax.nn.softmax(top_logits, axis=-1)
    return top_logits, top_idx, weights


if __name__ == "__main__":
    key = jax.random.PRNGKey(0)
    kx, kw, kb = jax.random.split(key, 3)

    # deterministic synthetic parameters
    # (shapes from nn.Linear(in_features, sum(grid_size)))
    x = jax.random.normal(kx, (BATCH, IN_FEATURES), dtype=jnp.float32)
    w = jax.random.normal(kw, (IN_FEATURES, sum(GRID_SIZE)), dtype=jnp.float32) * 0.1
    b = jax.random.normal(kb, (1, sum(GRID_SIZE)), dtype=jnp.float32) * 0.1

    expert_idx, logits, weights = jax.block_until_ready(gating_forward(x, w, b))

    ref_logits, ref_idx, ref_weights = _reference(x, w, b)
    flat_idx = expert_idx[..., 0] * GRID_SIZE[1] + expert_idx[..., 1]

    # W'-fusion changes f32 summation order by ~1e-7 relative; 1e-5 still holds.
    assert jnp.allclose(logits, ref_logits, atol=1e-5, rtol=1e-5)
    assert jnp.array_equal(flat_idx, ref_idx)
    assert jnp.allclose(weights, ref_weights, atol=1e-5, rtol=1e-5)
    assert jnp.allclose(jnp.sum(weights, axis=-1), 1.0, atol=1e-5)

    print("KERNEL_OK")
</pallas_src>

<mosaic_0001>
module attributes {stable_mosaic.version = 11 : i64} {
  func.func @fused_gating_kernel(%arg0: i32, %arg1: memref<8x32xf32, #tpu.memory_space<vmem>>, %arg2: memref<32x32xf32, #tpu.memory_space<vmem>>, %arg3: memref<1x32xf32, #tpu.memory_space<vmem>>, %arg4: memref<8x12xf32, #tpu.memory_space<vmem>>) attributes {dimension_semantics = [#tpu.dimension_semantics<parallel>], iteration_bounds = array<i64: 1>, scalar_prefetch = 0 : i64, scratch_operands = 0 : i64, tpu.core_type = #tpu.core_type<tc>, window_params = [{transform_indices = @transform_0, window_bounds = array<i64: 8, 32>}, {pipeline_mode = #tpu.pipeline_mode<synchronous>, transform_indices = @transform_1, window_bounds = array<i64: 32, 32>}, {pipeline_mode = #tpu.pipeline_mode<synchronous>, transform_indices = @transform_2, window_bounds = array<i64: 1, 32>}, {transform_indices = @transform_3, window_bounds = array<i64: 8, 12>}]} {
    %c0 = arith.constant 0 : index
    %c0_0 = arith.constant 0 : index
    %0 = vector.load %arg1[%c0, %c0_0] : memref<8x32xf32, #tpu.memory_space<vmem>>, vector<8x32xf32>
    %c0_1 = arith.constant 0 : index
    %c0_2 = arith.constant 0 : index
    %1 = vector.load %arg2[%c0_1, %c0_2] : memref<32x32xf32, #tpu.memory_space<vmem>>, vector<32x32xf32>
    %cst = arith.constant dense<0.000000e+00> : vector<8x32xf32>
    %2 = tpu.matmul %0, %1, %cst {dimension_numbers = #tpu.dot_dimension_numbers<[1], [0], [0], [1], [0, 0, 1, 1], [], []>} : vector<8x32xf32>, vector<32x32xf32>, vector<8x32xf32> -> vector<8x32xf32>
    %c0_3 = arith.constant 0 : index
    %c0_4 = arith.constant 0 : index
    %3 = vector.load %arg3[%c0_3, %c0_4] : memref<1x32xf32, #tpu.memory_space<vmem>>, vector<1x32xf32>
    %4 = vector.broadcast %3 : vector<1x32xf32> to vector<8x32xf32>
    %5 = arith.addf %2, %4 : vector<8x32xf32>
    %6 = tpu.iota {dimensions = array<i32: 1>} : vector<8x32xi32>
    %cst_5 = arith.constant dense<0xFF800000> : vector<8xf32>
    %7 = vector.multi_reduction <maximumf>, %5, %cst_5 [1] : vector<8x32xf32> to vector<8xf32>
    %8 = vector.shape_cast %7 : vector<8xf32> to vector<8x1xf32>
    %9 = vector.broadcast %8 : vector<8x1xf32> to vector<8x32xf32>
    %10 = arith.cmpf oeq, %5, %9 : vector<8x32xf32>
    %c32_i32 = arith.constant 32 : i32
    %11 = vector.broadcast %c32_i32 : i32 to vector<8x32xi32>
    %12 = arith.select %10, %6, %11 : vector<8x32xi1>, vector<8x32xi32>
    %cst_6 = arith.constant dense<2147483647> : vector<8xi32>
    %13 = vector.multi_reduction <minsi>, %12, %cst_6 [1] : vector<8x32xi32> to vector<8xi32>
    %14 = vector.shape_cast %13 : vector<8xi32> to vector<8x1xi32>
    %15 = vector.broadcast %14 : vector<8x1xi32> to vector<8x32xi32>
    %16 = arith.cmpi eq, %6, %15 : vector<8x32xi32>
    %cst_7 = arith.constant 0xFF800000 : f32
    %17 = vector.broadcast %cst_7 : f32 to vector<8x32xf32>
    %18 = arith.select %16, %17, %5 : vector<8x32xi1>, vector<8x32xf32>
    %cst_8 = arith.constant dense<0xFF800000> : vector<8xf32>
    %19 = vector.multi_reduction <maximumf>, %18, %cst_8 [1] : vector<8x32xf32> to vector<8xf32>
    %20 = vector.shape_cast %19 : vector<8xf32> to vector<8x1xf32>
    %21 = vector.broadcast %20 : vector<8x1xf32> to vector<8x32xf32>
    %22 = arith.cmpf oeq, %18, %21 : vector<8x32xf32>
    %c32_i32_9 = arith.constant 32 : i32
    %23 = vector.broadcast %c32_i32_9 : i32 to vector<8x32xi32>
    %24 = arith.select %22, %6, %23 : vector<8x32xi1>, vector<8x32xi32>
    %cst_10 = arith.constant dense<2147483647> : vector<8xi32>
    %25 = vector.multi_reduction <minsi>, %24, %cst_10 [1] : vector<8x32xi32> to vector<8xi32>
    %26 = vector.shape_cast %25 : vector<8xi32> to vector<8x1xi32>
    %27 = vector.broadcast %26 : vector<8x1xi32> to vector<8x32xi32>
    %28 = arith.cmpi eq, %6, %27 : vector<8x32xi32>
    %cst_11 = arith.constant 0xFF800000 : f32
    %29 = vector.broadcast %cst_11 : f32 to vector<8x32xf32>
    %30 = arith.select %28, %29, %18 : vector<8x32xi1>, vector<8x32xf32>
    %cst_12 = arith.constant dense<0xFF800000> : vector<8xf32>
    %31 = vector.multi_reduction <maximumf>, %30, %cst_12 [1] : vector<8x32xf32> to vector<8xf32>
    %32 = vector.shape_cast %31 : vector<8xf32> to vector<8x1xf32>
    %33 = vector.broadcast %32 : vector<8x1xf32> to vector<8x32xf32>
    %34 = arith.cmpf oeq, %30, %33 : vector<8x32xf32>
    %c32_i32_13 = arith.constant 32 : i32
    %35 = vector.broadcast %c32_i32_13 : i32 to vector<8x32xi32>
    %36 = arith.select %34, %6, %35 : vector<8x32xi1>, vector<8x32xi32>
    %cst_14 = arith.constant dense<2147483647> : vector<8xi32>
    %37 = vector.multi_reduction <minsi>, %36, %cst_14 [1] : vector<8x32xi32> to vector<8xi32>
    %38 = vector.shape_cast %37 : vector<8xi32> to vector<8x1xi32>
    %39 = vector.broadcast %38 : vector<8x1xi32> to vector<8x32xi32>
    %40 = arith.cmpi eq, %6, %39 : vector<8x32xi32>
    %cst_15 = arith.constant 0xFF800000 : f32
    %41 = vector.broadcast %cst_15 : f32 to vector<8x32xf32>
    %42 = arith.select %40, %41, %30 : vector<8x32xi1>, vector<8x32xf32>
    %cst_16 = arith.constant dense<0xFF800000> : vector<8xf32>
    %43 = vector.multi_reduction <maximumf>, %42, %cst_16 [1] : vector<8x32xf32> to vector<8xf32>
    %44 = vector.shape_cast %43 : vector<8xf32> to vector<8x1xf32>
    %45 = vector.broadcast %44 : vector<8x1xf32> to vector<8x32xf32>
    %46 = arith.cmpf oeq, %42, %45 : vector<8x32xf32>
    %c32_i32_17 = arith.constant 32 : i32
    %47 = vector.broadcast %c32_i32_17 : i32 to vector<8x32xi32>
    %48 = arith.select %46, %6, %47 : vector<8x32xi1>, vector<8x32xi32>
    %cst_18 = arith.constant dense<2147483647> : vector<8xi32>
    %49 = vector.multi_reduction <minsi>, %48, %cst_18 [1] : vector<8x32xi32> to vector<8xi32>
    %50 = vector.shape_cast %49 : vector<8xi32> to vector<8x1xi32>
    %51 = tpu.concatenate %8, %20, %32, %44 in 1 : vector<8x1xf32>, vector<8x1xf32>, vector<8x1xf32>, vector<8x1xf32> -> vector<8x4xf32>
    %52 = tpu.concatenate %14, %26, %38, %50 in 1 : vector<8x1xi32>, vector<8x1xi32>, vector<8x1xi32>, vector<8x1xi32> -> vector<8x4xi32>
    %53 = vector.broadcast %8 : vector<8x1xf32> to vector<8x4xf32>
    %54 = arith.subf %51, %53 : vector<8x4xf32>
    %55 = math.exp %54 : vector<8x4xf32>
    %cst_19 = arith.constant dense<0.000000e+00> : vector<8xf32>
    %56 = vector.multi_reduction <add>, %55, %cst_19 [1] : vector<8x4xf32> to vector<8xf32>
    %57 = vector.shape_cast %56 : vector<8xf32> to vector<8x1xf32>
    %58 = vector.broadcast %57 : vector<8x1xf32> to vector<8x4xf32>
    %59 = arith.divf %55, %58 : vector<8x4xf32>
    %60 = tpu.bitcast %52 : vector<8x4xi32> -> vector<8x4xf32>
    %61 = tpu.concatenate %51, %59, %60 in 1 : vector<8x4xf32>, vector<8x4xf32>, vector<8x4xf32> -> vector<8x12xf32>
    %c0_20 = arith.constant 0 : index
    %c0_21 = arith.constant 0 : index
    %62 = vector.load %arg4[%c0_20, %c0_21] : memref<8x12xf32, #tpu.memory_space<vmem>>, vector<8x12xf32>
    tpu.vector_store %arg4[%c0_20, %c0_21], %61 {strides = array<i32>} : memref<8x12xf32, #tpu.memory_space<vmem>>, vector<8x12xf32>,
    return
  }
  func.func @transform_0(%arg0: i32) -> (i32, i32) {
    %c0_i32 = arith.constant 0 : i32
    %c0_i32_0 = arith.constant 0 : i32
    return %arg0, %c0_i32 : i32, i32
  }
  func.func @transform_1(%arg0: i32) -> (i32, i32) {
    %c0_i32 = arith.constant 0 : i32
    %c0_i32_0 = arith.constant 0 : i32
    %c0_i32_1 = arith.constant 0 : i32
    return %c0_i32, %c0_i32_0 : i32, i32
  }
  func.func @transform_2(%arg0: i32) -> (i32, i32) {
    %c0_i32 = arith.constant 0 : i32
    %c0_i32_0 = arith.constant 0 : i32
    %c0_i32_1 = arith.constant 0 : i32
    return %c0_i32, %c0_i32_0 : i32, i32
  }
  func.func @transform_3(%arg0: i32) -> (i32, i32) {
    %c0_i32 = arith.constant 0 : i32
    %c0_i32_0 = arith.constant 0 : i32
    return %arg0, %c0_i32 : i32, i32
  }
}

</mosaic_0001>

<llo_original>
// kernel: tpu_custom_call.1
$region0: #{tpu_custom_call.1}
  #allocation0 [shape = 'u32[]', space=smem, size = 0x4, offset = 0x4, fixed_abs, tag = 'smem constant byte address 0x4 - core index']
  #allocation1 [shape = 'u32[144,128]{1,0:T(1,128)}', space=vmem, size = 0x12000, scoped, tag = 'internal scratch']
  %s0 = inlined_call_operand.hbm [shape: f32[8,32], index: 0, kind: input, shape index: {}]
  %s1 = inlined_call_operand.hbm [shape: f32[32,32], index: 1, kind: input, shape index: {}]
  %s2 = inlined_call_operand.vmem [shape: f32[1,32], index: 2, kind: input, shape index: {}]
  %s3 = inlined_call_operand.hbm [shape: f32[8,12], index: 3, kind: output, shape index: {}]
  %s4 = sld [smem:[#allocation0]]
  $region30: #{tpu_custom_call.1} parent=0
    _
  %s6 = ssub.s32 1, %s4
  %s7 = scalar_select 0, %s6, %s4
  $region1: #{tpu_custom_call.1} parent=0
    #allocation2 [shape = 'u8[4096]{0}', space=vmem, size = 0x1000, scoped, tag = 'input window, operand 0, single buffered']
    #allocation3 [shape = 's32[1]{0}', space=sflag, size = 0x4, scoped, tag = 'scoped memory for tpu_custom_call.1']
    #allocation4 [shape = 's32[1]{0}', space=sflag, size = 0x4, scoped, tag = 'scoped memory for tpu_custom_call.1']
    #allocation5 [shape = 'u8[16384]{0}', space=vmem, size = 0x4000, scoped, tag = 'input window, operand 1, single buffered']
    #allocation6 [shape = 's32[1]{0}', space=sflag, size = 0x4, scoped, tag = 'scoped memory for tpu_custom_call.1']
    #allocation7 [shape = 'u8[4096]{0}', space=vmem, size = 0x1000, scoped, tag = 'output window, operand 0, single buffered']
    %8 = vsyncpa [#allocation3], 0
    %9 = vsyncpa [#allocation6], 0
    %10 = vsyncpa [#allocation4], 0
    // Predicated region
    $region2: #{tpu_custom_call.1} parent=1 // pred_check
      _
    $region3: #{tpu_custom_call.1} parent=1 // pred_check_branch
      %12 = sbr.rel (0) target = $region5
    $region4: #{tpu_custom_call.1} parent=1 // pred_region
      %s14 = ssub.s32 128, 128
      %15 = vsyncadd [#allocation3], %s14
      %s17 = sshll.u32 [#allocation2], 4
      %s18 = int_to_ptr.vmem [resolvable:$true] %s17
      %20 = dma.hbm_to_vmem [thread:$0]  %s0, 128, %s18, [#allocation3]
    $region5: #{tpu_custom_call.1} parent=1 // pred_fallthru
      _
    // Predicated region
    $region6: #{tpu_custom_call.1} parent=1 // pred_check
      _
    $region7: #{tpu_custom_call.1} parent=1 // pred_check_branch
      %22 = sbr.rel (0) target = $region9
    $region8: #{tpu_custom_call.1} parent=1 // pred_region
      %s24 = ssub.s32 512, 512
      %25 = vsyncadd [#allocation6], %s24
      %s26 = sshll.u32 [#allocation5], 4
      %s27 = int_to_ptr.vmem [resolvable:$true] %s26
      %32 = dma.hbm_to_vmem [thread:$0]  %s1, 512, %s27, [#allocation6], 128, 128, 8
    $region9: #{tpu_custom_call.1} parent=1 // pred_fallthru
      _
    // Predicated region
    $region10: #{tpu_custom_call.1} parent=1 // pred_check
      _
    $region11: #{tpu_custom_call.1} parent=1 // pred_check_branch
      %34 = sbr.rel (0) target = $region13
    $region12: #{tpu_custom_call.1} parent=1 // pred_region
      _
    $region13: #{tpu_custom_call.1} parent=1 // pred_fallthru
      _
    // Predicated region
    $region14: #{tpu_custom_call.1} parent=1 // pred_check
      _
    $region15: #{tpu_custom_call.1} parent=1 // pred_check_branch
      %36 = sbr.rel (0) target = $region17
    $region16: #{tpu_custom_call.1} parent=1 // pred_region
      %37 = dma.done [#allocation3], 128
    $region17: #{tpu_custom_call.1} parent=1 // pred_fallthru
      _
    // Predicated region
    $region18: #{tpu_custom_call.1} parent=1 // pred_check
      _
    $region19: #{tpu_custom_call.1} parent=1 // pred_check_branch
      %39 = sbr.rel (0) target = $region21
    $region20: #{tpu_custom_call.1} parent=1 // pred_region
      %40 = dma.done [#allocation6], 512
    $region21: #{tpu_custom_call.1} parent=1 // pred_fallthru
      _
    %v41 = vld [vmem:[#allocation2] sm:$0xff]
    %v42 = vld [vmem:[#allocation5] sm:$0xff]
    %v43 = vld [vmem:[#allocation5 + $0x8] sm:$0xff]
    %v44 = vld [vmem:[#allocation5 + $0x10] sm:$0xff]
    %v45 = vld [vmem:[#allocation5 + $0x18] sm:$0xff]
    %v46 = vld [vmem:[%s2] sm:$0x1]
    %v48 = vlaneseq
    %v49 = vshrl.u32 %v48, 7
    %v50 = vsub.s32 0, %v49
    %v51 = vrot.slane %v46, %v50
    %vm53 = vcmask 261120
    %v55 = vsel %vm53, %v41, 0
    %57 = vmatprep.subr.mxu0 0.0
    %58 = vmatpush1.msra.mxu0 %v42
    %59 = vmatprep.subr.mxu0 0.0
    %60 = vmatpush1.msra.mxu0 %v43
    %61 = vmatprep.subr.mxu0 0.0
    %62 = vmatpush1.msra.mxu0 %v44
    %63 = vmatprep.subr.mxu0 0.0
    %64 = vmatpush1.msra.mxu0 %v45
    %65 = vmatprep.subr.mxu0 0.0
    %66 = vmatpush1.msra.mxu0 0.0
    %67 = vmatprep.subr.mxu0 0.0
    %68 = vmatpush1.msra.mxu0 0.0
    %69 = vmatprep.subr.mxu0 0.0
    %70 = vmatpush1.msra.mxu0 0.0
    %71 = vmatprep.subr.mxu0 0.0
    %72 = vmatpush1.msra.mxu0 0.0
    %73 = vmatprep.subr.mxu0 0.0
    %74 = vmatpush1.msra.mxu0 0.0
    %75 = vmatprep.subr.mxu0 0.0
    %76 = vmatpush1.msra.mxu0 0.0
    %77 = vmatprep.subr.mxu0 0.0
    %78 = vmatpush1.msra.mxu0 0.0
    %79 = vmatprep.subr.mxu0 0.0
    %80 = vmatpush1.msra.mxu0 0.0
    %81 = vmatprep.subr.mxu0 0.0
    %82 = vmatpush1.msra.mxu0 0.0
    %83 = vmatprep.subr.mxu0 0.0
    %84 = vmatpush1.msra.mxu0 0.0
    %85 = vmatprep.subr.mxu0 0.0
    %86 = vmatpush1.msra.mxu0 0.0
    %87 = vmatprep.subr.mxu0 0.0
    %88 = vmatpush1.msra.mxu0 0.0
    %89 = vmatprep.subr.mxu0 0.0
    %90 = vmatpush1.msra.mxu0 0.0
    %91 = vmatprep.subr.mxu0 0.0
    %92 = vmatpush1.msra.mxu0 0.0
    %93 = vmatprep.subr.mxu0 0.0
    %94 = vmatpush1.msra.mxu0 0.0
    %95 = vmatprep.subr.mxu0 0.0
    %96 = vmatpush1.msra.mxu0 0.0
    %97 = vmatprep.subr.mxu0 0.0
    %98 = vmatpush1.msra.mxu0 0.0
    %99 = vmatprep.subr.mxu0 0.0
    %100 = vmatpush1.msra.mxu0 0.0
    %101 = vmatprep.subr.mxu0 0.0
    %102 = vmatpush1.msra.mxu0 0.0
    %103 = vmatprep.subr.mxu0 0.0
    %104 = vmatpush1.msra.mxu0 0.0
    %105 = vmatprep.subr.mxu0 0.0
    %106 = vmatpush1.msra.mxu0 0.0
    %107 = vmatprep.subr.mxu0 0.0
    %108 = vmatpush1.msra.mxu0 0.0
    %109 = vmatprep.subr.mxu0 0.0
    %110 = vmatpush1.msra.mxu0 0.0
    %111 = vmatprep.subr.mxu0 0.0
    %112 = vmatpush1.msra.mxu0 0.0
    %113 = vmatprep.subr.mxu0 0.0
    %114 = vmatpush1.msra.mxu0 0.0
    %115 = vmatprep.subr.mxu0 0.0
    %116 = vmatpush1.msra.mxu0 0.0
    %117 = vmatprep.subr.mxu0 0.0
    %118 = vmatpush1.msra.mxu0 0.0
    %119 = vmatprep.subr.mxu0 0.0
    %120 = vmatpush1.msra.mxu0 0.0
    %121 = vmatprep.mubr.f32.mxu0 0.0
    %122 = vmatmul.mubr.f32.gmra.mrb[0].mxu0 %v55
    %v123 = vpop.f32.mrb[0].mxu0
    %v124 = vadd.f32 %v51, %v123
    %v125 = vpop.f32.mrb[0].mxu0
    %126 = vdwg.mxu0
    %v127 = vlaneseq
    %v128 = vand.u32 %v127, 127
    %v129 = vsel %vm53, %v124, -inf
    %130 = vmax.xlane.f32.xlu0 %v129
    %v131 = vpop.xlane.xlu0 %130
    %vm132 = vcmp.eq.f32.partialorder %v124, %v131
    %v133 = vsel %vm132, %v128, 32
    %v134 = vsel %vm53, %v133, 2147483647
    %v135 = vand.u32 %v134, 65535
    %v136 = vshra.s32 %v134, 16
    %v137 = vcvt.s32.f32 %v135
    %v138 = vcvt.s32.f32 %v136
    %139 = vmin.xlane.f32.xlu0 %v138
    %v140 = vpop.xlane.xlu0 %139
    %vm141 = vcmp.eq.f32.partialorder %v138, %v140
    %v142 = vsel %vm141, %v137, inf
    %143 = vmin.xlane.f32.xlu0 %v142
    %v144 = vpop.xlane.xlu0 %143
    %v145 = vcvt.f32.s32 %v144
    %v146 = vcvt.f32.s32 %v140
    %v147 = vshll.u32 %v146, 16
    %v148 = vadd.s32 %v147, %v145
    %vm149 = vcmp.eq.s32.totalorder %v128, %v148
    %v150 = vsel %vm149, -inf, %v124
    %v151 = vsel %vm53, %v150, -inf
    %152 = vmax.xlane.f32.xlu0 %v151
    %v153 = vpop.xlane.xlu0 %152
    %vm154 = vcmp.eq.f32.partialorder %v150, %v153
    %v155 = vsel %vm154, %v128, 32
    %v156 = vsel %vm53, %v155, 2147483647
    %v157 = vand.u32 %v156, 65535
    %v158 = vshra.s32 %v156, 16
    %v159 = vcvt.s32.f32 %v157
    %v160 = vcvt.s32.f32 %v158
    %161 = vmin.xlane.f32.xlu0 %v160
    %v162 = vpop.xlane.xlu0 %161
    %vm163 = vcmp.eq.f32.partialorder %v160, %v162
    %v164 = vsel %vm163, %v159, inf
    %165 = vmin.xlane.f32.xlu0 %v164
    %v166 = vpop.xlane.xlu0 %165
    %v167 = vcvt.f32.s32 %v166
    %v168 = vcvt.f32.s32 %v162
    %v169 = vshll.u32 %v168, 16
    %v170 = vadd.s32 %v169, %v167
    %vm171 = vcmp.eq.s32.totalorder %v128, %v170
    %v172 = vsel %vm171, -inf, %v150
    %v173 = vsel %vm53, %v172, -inf
    %174 = vmax.xlane.f32.xlu0 %v173
    %v175 = vpop.xlane.xlu0 %174
    %vm176 = vcmp.eq.f32.partialorder %v172, %v175
    %v177 = vsel %vm176, %v128, 32
    %v178 = vsel %vm53, %v177, 2147483647
    %v179 = vand.u32 %v178, 65535
    %v180 = vshra.s32 %v178, 16
    %v181 = vcvt.s32.f32 %v179
    %v182 = vcvt.s32.f32 %v180
    %183 = vmin.xlane.f32.xlu0 %v182
    %v184 = vpop.xlane.xlu0 %183
    %vm185 = vcmp.eq.f32.partialorder %v182, %v184
    %v186 = vsel %vm185, %v181, inf
    %187 = vmin.xlane.f32.xlu0 %v186
    %v188 = vpop.xlane.xlu0 %187
    %v189 = vcvt.f32.s32 %v188
    %v190 = vcvt.f32.s32 %v184
    %v191 = vshll.u32 %v190, 16
    %v192 = vadd.s32 %v191, %v189
    %vm193 = vcmp.eq.s32.totalorder %v128, %v192
    %v194 = vsel %vm193, -inf, %v172
    %v195 = vsel %vm53, %v194, -inf
    %196 = vmax.xlane.f32.xlu0 %v195
    %v197 = vpop.xlane.xlu0 %196
    %vm198 = vcmp.eq.f32.partialorder %v194, %v197
    %v199 = vsel %vm198, %v128, 32
    %v200 = vsel %vm53, %v199, 2147483647
    %v201 = vand.u32 %v200, 65535
    %v202 = vshra.s32 %v200, 16
    %v203 = vcvt.s32.f32 %v201
    %v204 = vcvt.s32.f32 %v202
    %205 = vmin.xlane.f32.xlu0 %v204
    %v206 = vpop.xlane.xlu0 %205
    %vm207 = vcmp.eq.f32.partialorder %v204, %v206
    %v208 = vsel %vm207, %v203, inf
    %209 = vmin.xlane.f32.xlu0 %v208
    %v210 = vpop.xlane.xlu0 %209
    %v211 = vcvt.f32.s32 %v210
    %v212 = vcvt.f32.s32 %v206
    %v213 = vshll.u32 %v212, 16
    %v214 = vadd.s32 %v213, %v211
    %vm215 = vcmask 7168
    %v216 = vsel %vm215, %v131, %v153
    %vm217 = vcmask 15360
    %v218 = vsel %vm217, %v216, %v175
    %vm219 = vcmask 23552
    %v220 = vsel %vm219, %v218, %v197
    %v221 = vsel %vm215, %v148, %v170
    %v222 = vsel %vm217, %v221, %v192
    %v223 = vsel %vm219, %v222, %v214
    %v224 = vsub.f32 %v220, %v131
    %v225 = vmul.f32 %v224, 1.442695
    %v226 = vpow.pop %v225
    %vm227 = vcmask 31744
    %v228 = vsel %vm227, %v226, 0.0
    %229 = vadd.xlane.f32.xlu0 %v228
    %v230 = vpop.xlane.xlu0 %229
    %v231 = vrcp.pop %v230
    %v232 = vmul.f32 %v226, %v231
    %234 = vrot.lane.b32.xlu0 %v232, 4
    %v235 = vpop.permute.xlu0 %234
    %237 = vrot.lane.b32.xlu0 %v223, 8
    %v238 = vpop.permute.xlu0 %237
    %v240 = vsel %vm227, %v220, %v235
    %vm241 = vcmask 64512
    %v242 = vsel %vm241, %v240, %v238
    %vm243 = vcmask 97280
    %244 = vst.msk [vmem:[#allocation7] sm:$0xff] %vm243, %v242
    // Predicated region
    $region22: #{tpu_custom_call.1} parent=1 // pred_check
      _
    $region23: #{tpu_custom_call.1} parent=1 // pred_check_branch
      %246 = sbr.rel (0) target = $region25
    $region24: #{tpu_custom_call.1} parent=1 // pred_region
      %s248 = ssub.s32 128, 128
      %249 = vsyncadd [#allocation4], %s248
      %s251 = sshll.u32 [#allocation7], 4
      %s252 = int_to_ptr.vmem [resolvable:$true] %s251
      %254 = dma.vmem_to_hbm [thread:$0]  %s252, 128, %s3, [#allocation4]
    $region25: #{tpu_custom_call.1} parent=1 // pred_fallthru
      _
    // Predicated region
    $region26: #{tpu_custom_call.1} parent=1 // pred_check
      _
    $region27: #{tpu_custom_call.1} parent=1 // pred_check_branch
      %256 = sbr.rel (0) target = $region29
    $region28: #{tpu_custom_call.1} parent=1 // pred_region
      %257 = dma.done [#allocation4], 128
    $region29: #{tpu_custom_call.1} parent=1 // pred_fallthru
      _
    %258 = vsyncpa [#allocation3], 1
    %259 = vsyncpa [#allocation6], 1
    %260 = vsyncpa [#allocation4], 1

</llo_original>
